<compile_context>
chip_gen: v7x
topology: tpu7x:2x2x1
jax: 0.10.0
libtpu: 0.0.40
codegen_flags: <defaults>
</compile_context>

<pallas_src>
import functools

import jax
import jax.numpy as jnp
from jax.experimental import pallas as pl
from jax.experimental.pallas import tpu as pltpu

_LANE = 128
_VMEM_WORKSET_BUDGET = 40 << 20   # target working-set bytes (fits every gen)
_VMEM_LIMIT_CAP = 60 << 20        # stay under v7x's 64 MiB physical VMEM


def _round_up(n, m):
    return ((n + m - 1) // m) * m


def _mlp_kernel(x_ref, w1_ref, b1_ref, w2_ref, b2_ref, w3_ref, b3_ref, o_ref):
    """One batch tile, computed batch-on-lanes.

    x_ref : (TB, D_in)  bf16 batch tile (rows = batch)
    w1_ref: (H1, D_in)  bf16      b1_ref: (H1, 1) f32
    w2_ref: (H2, H1)    bf16      b2_ref: (H2, 1) f32
    w3_ref: (H2, 1)     f32       b3_ref: (1,)    f32 scalar in SMEM
    o_ref : (1, TB)     f32 lane-dense output row for this tile
    """
    x = x_ref[...]                                               # (TB, D_in) bf16

    # lin1 + relu: W1 @ x^T -> (H1, TB).  Contract both operands on their last
    # dim so x never needs an in-kernel transpose.  f32 accumulation on MXU.
    h1 = jax.lax.dot_general(
        w1_ref[...], x,
        dimension_numbers=(((1,), (1,)), ((), ())),
        preferred_element_type=jnp.float32,
    ) + b1_ref[...]
    h1 = jnp.maximum(h1, 0.0)                                    # (H1, TB) f32

    # lin2 + relu: W2 @ h1 -> (H2, TB).  Feed the MXU bf16 operands again.
    h2 = jnp.dot(w2_ref[...], h1.astype(w2_ref.dtype),
                 preferred_element_type=jnp.float32) + b2_ref[...]
    h2 = jnp.maximum(h2, 0.0)                                    # (H2, TB) f32

    # lin3 (out_features == 1): VPU broadcast-multiply + sublane reduce in f32.
    # Result is already lane-dense (1, TB); the MXU is not involved.
    out = jnp.sum(h2 * w3_ref[...], axis=0, keepdims=True) + b3_ref[0]
    o_ref[...] = out.astype(o_ref.dtype)


def _vmem_per_row_bytes(d_in, h1, h2):
    # bf16 x tile (double-buffered) + f32 h1/h2 working set (+ bf16 h1 copy)
    # + double-buffered f32 output row.
    return 2 * d_in * 2 + (h1 + h2) * 4 + h1 * 2 + 2 * 4


def _vmem_fixed_bytes(d_in, h1, h2):
    # Resident weights/biases (constant index_map still allocates 2 buffers).
    w_bytes = (h1 * d_in + h2 * h1) * 2          # bf16 W1, W2
    b_bytes = (h1 + h2 + h2 + 1) * 4             # f32 b1, b2, w3, b3
    return 2 * (w_bytes + b_bytes)


@functools.partial(jax.jit, static_argnames=("max_batch_tile",))
def regression_network_forward(x, params, max_batch_tile=4096):
    """params: dict with PyTorch-shaped weights (out, in) and biases (out,)."""
    B, D_in = x.shape
    H1 = params["w1"].shape[0]
    H2 = params["w2"].shape[0]

    # ---- tile-size policy -------------------------------------------------
    row_bytes = _vmem_per_row_bytes(D_in, H1, H2)
    fixed_bytes = _vmem_fixed_bytes(D_in, H1, H2)
    avail = max(_VMEM_WORKSET_BUDGET - fixed_bytes, row_bytes * _LANE)
    tb_cap = max(_LANE, (avail // row_bytes) // _LANE * _LANE)

    if B <= 64:
        # Tiny batch: one sublane-padded tile (masked store cost is negligible).
        tb = _round_up(max(B, 1), 8)
    else:
        # Lane-aligned tiles, at least 2 of them so the "parallel" grid axis
        # keeps both v7x TensorCores busy; capped by VMEM budget and the
        # big-tile ceiling that keeps step count single-digit for huge B.
        two_tile = _round_up(pl.cdiv(B, 2), _LANE)
        tb = min(_round_up(max_batch_tile, _LANE), tb_cap, two_tile)
        tb = max(tb, _LANE)

    B_pad = _round_up(B, tb)
    num_tiles = B_pad // tb

    vmem_limit = int(min(max(fixed_bytes + row_bytes * tb + (4 << 20), 32 << 20),
                         _VMEM_LIMIT_CAP))

    # ---- operand prep (layout plumbing only) ------------------------------
    if B_pad != B:
        x = jnp.pad(x, ((0, B_pad - B), (0, 0)))
    x_bf16 = x.astype(jnp.bfloat16)

    w1 = params["w1"].astype(jnp.bfloat16)                    # (H1, D_in)
    w2 = params["w2"].astype(jnp.bfloat16)                    # (H2, H1)
    b1 = params["b1"].reshape(H1, 1).astype(jnp.float32)      # (H1, 1)
    b2 = params["b2"].reshape(H2, 1).astype(jnp.float32)      # (H2, 1)
    w3 = params["w3"].reshape(H2, 1).astype(jnp.float32)      # lin3.weight -> column
    b3 = params["b3"].reshape(1).astype(jnp.float32)          # scalar, lives in SMEM

    # Constant index_map => weights/biases stay resident in VMEM across steps.
    full = lambda shape: pl.BlockSpec(shape, lambda i: (0, 0))

    out = pl.pallas_call(
        _mlp_kernel,
        out_shape=jax.ShapeDtypeStruct((1, B_pad), jnp.float32),
        grid_spec=pltpu.PrefetchScalarGridSpec(
            num_scalar_prefetch=0,
            grid=(num_tiles,),
            in_specs=[
                pl.BlockSpec((tb, D_in), lambda i: (i, 0)),     # x tile
                full((H1, D_in)), full((H1, 1)),
                full((H2, H1)), full((H2, 1)),
                full((H2, 1)),
                pl.BlockSpec(memory_space=pltpu.MemorySpace.SMEM),  # b3 scalar
            ],
            out_specs=pl.BlockSpec((1, tb), lambda i: (0, i)),  # lane-dense row
        ),
        compiler_params=pltpu.CompilerParams(
            dimension_semantics=("parallel",),
            vmem_limit_bytes=vmem_limit,
        ),
    )(x_bf16, w1, b1, w2, b2, w3, b3)

    # Layout plumbing only: (1, B_pad) lane-dense slab -> (B, 1) column.
    return out.reshape(B_pad, 1)[:B]


def init_params(key, input_size, layers):
    """Deterministic init matching PyTorch nn.Linear shapes/uniform init."""
    assert len(layers) == 2, "this script instantiates the nlayers == 2 branch"
    h1, h2 = layers
    ks = jax.random.split(key, 6)

    def uni(k, shape, fan_in):
        bound = 1.0 / jnp.sqrt(fan_in)
        return jax.random.uniform(k, shape, jnp.float32, -bound, bound)

    return {
        "w1": uni(ks[0], (h1, input_size), input_size),
        "b1": uni(ks[1], (h1,), input_size),
        "w2": uni(ks[2], (h2, h1), h1),
        "b2": uni(ks[3], (h2,), h1),
        "w3": uni(ks[4], (1, h2), h2),
        "b3": uni(ks[5], (1,), h2),
    }


def _reference_forward_f32(x, p):
    h1 = jnp.maximum(x @ p["w1"].T + p["b1"], 0.0)
    h2 = jnp.maximum(h1 @ p["w2"].T + p["b2"], 0.0)
    return h2 @ p["w3"].T + p["b3"]


def _reference_forward_bf16(x, p):
    """Matches the kernel's mixed precision: bf16 x/W1/W2 operands, f32 accum."""
    xb = x.astype(jnp.bfloat16)
    w1 = p["w1"].astype(jnp.bfloat16)
    w2 = p["w2"].astype(jnp.bfloat16)
    h1 = jax.lax.dot_general(xb, w1, (((1,), (1,)), ((), ())),
                             preferred_element_type=jnp.float32) + p["b1"]
    h1 = jnp.maximum(h1, 0.0)
    h2 = jax.lax.dot_general(h1.astype(jnp.bfloat16), w2, (((1,), (1,)), ((), ())),
                             preferred_element_type=jnp.float32) + p["b2"]
    h2 = jnp.maximum(h2, 0.0)
    return h2 @ p["w3"].T + p["b3"]


if __name__ == "__main__":
    key = jax.random.PRNGKey(0)
    k_param, k_x1, k_x2, k_x3 = jax.random.split(key, 4)

    input_size, layers = 32, [64, 32]
    params = init_params(k_param, input_size, layers)

    def check(x, name):
        out = jax.block_until_ready(regression_network_forward(x, params))
        assert out.shape == (x.shape[0], 1), (name, out.shape)
        ref_mixed = _reference_forward_bf16(x, params)   # same precision recipe
        ref_full = _reference_forward_f32(x, params)     # original f32 semantics
        err_mixed = float(jnp.max(jnp.abs(out - ref_mixed)))
        err_full = float(jnp.max(jnp.abs(out - ref_full)))
        assert jnp.allclose(out, ref_mixed, atol=1e-3, rtol=1e-3), (name, err_mixed)
        assert jnp.allclose(out, ref_full, atol=5e-2, rtol=5e-2), (name, err_full)

    # Case 1: small batch (single tiny tile), RegressionNetwork(32, [64, 32]) on 8 rows.
    check(jax.random.normal(k_x1, (8, input_size), jnp.float32), "batch8")

    # Case 2: ragged batch -> two lane-dense 256-row tiles (feeds both v7x TCs).
    check(jax.random.normal(k_x2, (300, input_size), jnp.float32), "batch300")

    # Case 3: large batch -> 4096-row tiles (big-tile / VMEM-budget path).
    check(jax.random.normal(k_x3, (9000, input_size), jnp.float32), "batch9000")

    print("KERNEL_OK")
</pallas_src>

<mosaic_0001>
module attributes {stable_mosaic.version = 11 : i64} {
  func.func @_mlp_kernel(%arg0: i32, %arg1: memref<8x32xbf16, #tpu.memory_space<vmem>>, %arg2: memref<64x32xbf16, #tpu.memory_space<vmem>>, %arg3: memref<64x1xf32, #tpu.memory_space<vmem>>, %arg4: memref<32x64xbf16, #tpu.memory_space<vmem>>, %arg5: memref<32x1xf32, #tpu.memory_space<vmem>>, %arg6: memref<32x1xf32, #tpu.memory_space<vmem>>, %arg7: memref<1xf32, #tpu.memory_space<smem>>, %arg8: memref<1x8xf32, #tpu.memory_space<vmem>>) attributes {dimension_semantics = [#tpu.dimension_semantics<parallel>], iteration_bounds = array<i64: 1>, scalar_prefetch = 0 : i64, scratch_operands = 0 : i64, tpu.core_type = #tpu.core_type<tc>, window_params = [{transform_indices = @transform_0, window_bounds = array<i64: 8, 32>}, {pipeline_mode = #tpu.pipeline_mode<synchronous>, transform_indices = @transform_1, window_bounds = array<i64: 64, 32>}, {pipeline_mode = #tpu.pipeline_mode<synchronous>, transform_indices = @transform_2, window_bounds = array<i64: 64, 1>}, {pipeline_mode = #tpu.pipeline_mode<synchronous>, transform_indices = @transform_3, window_bounds = array<i64: 32, 64>}, {pipeline_mode = #tpu.pipeline_mode<synchronous>, transform_indices = @transform_4, window_bounds = array<i64: 32, 1>}, {pipeline_mode = #tpu.pipeline_mode<synchronous>, transform_indices = @transform_5, window_bounds = array<i64: 32, 1>}, {transform_indices = @transform_6, window_bounds = array<i64: 1>}, {transform_indices = @transform_7, window_bounds = array<i64: 1, 8>}]} {
    %c0 = arith.constant 0 : index
    %c0_0 = arith.constant 0 : index
    %0 = vector.load %arg1[%c0, %c0_0] : memref<8x32xbf16, #tpu.memory_space<vmem>>, vector<8x32xbf16>
    %c0_1 = arith.constant 0 : index
    %c0_2 = arith.constant 0 : index
    %1 = vector.load %arg2[%c0_1, %c0_2] : memref<64x32xbf16, #tpu.memory_space<vmem>>, vector<64x32xbf16>
    %cst = arith.constant dense<0.000000e+00> : vector<64x8xf32>
    %2 = tpu.matmul %1, %0, %cst {dimension_numbers = #tpu.dot_dimension_numbers<[1], [1], [0], [0], [0, 0, 1, 0], [], []>} : vector<64x32xbf16>, vector<8x32xbf16>, vector<64x8xf32> -> vector<64x8xf32>
    %c0_3 = arith.constant 0 : index
    %c0_4 = arith.constant 0 : index
    %3 = vector.load %arg3[%c0_3, %c0_4] : memref<64x1xf32, #tpu.memory_space<vmem>>, vector<64x1xf32>
    %4 = vector.broadcast %3 : vector<64x1xf32> to vector<64x8xf32>
    %5 = arith.addf %2, %4 : vector<64x8xf32>
    %cst_5 = arith.constant 0.000000e+00 : f32
    %6 = vector.broadcast %cst_5 : f32 to vector<64x8xf32>
    %7 = arith.maximumf %5, %6 : vector<64x8xf32>
    %c0_6 = arith.constant 0 : index
    %c0_7 = arith.constant 0 : index
    %8 = vector.load %arg4[%c0_6, %c0_7] : memref<32x64xbf16, #tpu.memory_space<vmem>>, vector<32x64xbf16>
    %9 = arith.truncf %7 : vector<64x8xf32> to vector<64x8xbf16>
    %cst_8 = arith.constant dense<0.000000e+00> : vector<32x8xf32>
    %10 = tpu.matmul %8, %9, %cst_8 {dimension_numbers = #tpu.dot_dimension_numbers<[1], [0], [0], [1], [0, 0, 1, 1], [], []>} : vector<32x64xbf16>, vector<64x8xbf16>, vector<32x8xf32> -> vector<32x8xf32>
    %c0_9 = arith.constant 0 : index
    %c0_10 = arith.constant 0 : index
    %11 = vector.load %arg5[%c0_9, %c0_10] : memref<32x1xf32, #tpu.memory_space<vmem>>, vector<32x1xf32>
    %12 = vector.broadcast %11 : vector<32x1xf32> to vector<32x8xf32>
    %13 = arith.addf %10, %12 : vector<32x8xf32>
    %cst_11 = arith.constant 0.000000e+00 : f32
    %14 = vector.broadcast %cst_11 : f32 to vector<32x8xf32>
    %15 = arith.maximumf %13, %14 : vector<32x8xf32>
    %c0_12 = arith.constant 0 : index
    %c0_13 = arith.constant 0 : index
    %16 = vector.load %arg6[%c0_12, %c0_13] : memref<32x1xf32, #tpu.memory_space<vmem>>, vector<32x1xf32>
    %17 = vector.broadcast %16 : vector<32x1xf32> to vector<32x8xf32>
    %18 = arith.mulf %15, %17 : vector<32x8xf32>
    %cst_14 = arith.constant dense<0.000000e+00> : vector<8xf32>
    %19 = vector.multi_reduction <add>, %18, %cst_14 [0] : vector<32x8xf32> to vector<8xf32>
    %20 = vector.shape_cast %19 : vector<8xf32> to vector<1x8xf32>
    %c0_15 = arith.constant 0 : index
    %21 = memref.load %arg7[%c0_15] : memref<1xf32, #tpu.memory_space<smem>>
    %22 = vector.broadcast %21 : f32 to vector<1x8xf32>
    %23 = arith.addf %20, %22 : vector<1x8xf32>
    %c0_16 = arith.constant 0 : index
    %c0_17 = arith.constant 0 : index
    %24 = vector.load %arg8[%c0_16, %c0_17] : memref<1x8xf32, #tpu.memory_space<vmem>>, vector<1x8xf32>
    tpu.vector_store %arg8[%c0_16, %c0_17], %23 {strides = array<i32>} : memref<1x8xf32, #tpu.memory_space<vmem>>, vector<1x8xf32>,
    return
  }
  func.func @transform_0(%arg0: i32) -> (i32, i32) {
    %c0_i32 = arith.constant 0 : i32
    %c0_i32_0 = arith.constant 0 : i32
    return %arg0, %c0_i32 : i32, i32
  }
  func.func @transform_1(%arg0: i32) -> (i32, i32) {
    %c0_i32 = arith.constant 0 : i32
    %c0_i32_0 = arith.constant 0 : i32
    %c0_i32_1 = arith.constant 0 : i32
    return %c0_i32, %c0_i32_0 : i32, i32
  }
  func.func @transform_2(%arg0: i32) -> (i32, i32) {
    %c0_i32 = arith.constant 0 : i32
    %c0_i32_0 = arith.constant 0 : i32
    %c0_i32_1 = arith.constant 0 : i32
    return %c0_i32, %c0_i32_0 : i32, i32
  }
  func.func @transform_3(%arg0: i32) -> (i32, i32) {
    %c0_i32 = arith.constant 0 : i32
    %c0_i32_0 = arith.constant 0 : i32
    %c0_i32_1 = arith.constant 0 : i32
    return %c0_i32, %c0_i32_0 : i32, i32
  }
  func.func @transform_4(%arg0: i32) -> (i32, i32) {
    %c0_i32 = arith.constant 0 : i32
    %c0_i32_0 = arith.constant 0 : i32
    %c0_i32_1 = arith.constant 0 : i32
    return %c0_i32, %c0_i32_0 : i32, i32
  }
  func.func @transform_5(%arg0: i32) -> (i32, i32) {
    %c0_i32 = arith.constant 0 : i32
    %c0_i32_0 = arith.constant 0 : i32
    %c0_i32_1 = arith.constant 0 : i32
    return %c0_i32, %c0_i32_0 : i32, i32
  }
  func.func @transform_6(%arg0: i32) -> i32 {
    %c0_i32 = arith.constant 0 : i32
    %c0_i32_0 = arith.constant 0 : i32
    return %c0_i32 : i32
  }
  func.func @transform_7(%arg0: i32) -> (i32, i32) {
    %c0_i32 = arith.constant 0 : i32
    %c0_i32_0 = arith.constant 0 : i32
    return %c0_i32, %arg0 : i32, i32
  }
}

</mosaic_0001>

<llo_original>
// kernel: regression_network_forward.1
$region0: #{regression_network_forward.1}
  #allocation0 [shape = 'u32[]', space=smem, size = 0x4, offset = 0x4, fixed_abs, tag = 'smem constant byte address 0x4 - core index']
  #allocation1 [shape = 'u32[144,128]{1,0:T(1,128)}', space=vmem, size = 0x12000, scoped, tag = 'internal scratch']
  #allocation2 [shape = 'f32[1]{0:T(128)S(6)}', space=smem, size = 0x200, scoped, tag = 'scoped memory for regression_network_forward.1']
  %s0 = inlined_call_operand.vmem [shape: bf16[8,32], index: 0, kind: input, shape index: {}]
  %s1 = inlined_call_operand.vmem [shape: bf16[64,32], index: 1, kind: input, shape index: {}]
  %s2 = inlined_call_operand.vmem [shape: f32[64,1], index: 2, kind: input, shape index: {}]
  %s3 = inlined_call_operand.vmem [shape: bf16[32,64], index: 3, kind: input, shape index: {}]
  %s4 = inlined_call_operand.vmem [shape: f32[32,1], index: 4, kind: input, shape index: {}]
  %s5 = inlined_call_operand.vmem [shape: f32[32,1], index: 5, kind: input, shape index: {}]
  %s6 = inlined_call_operand.<no memory space> [shape: f32[1], index: 6, kind: input, shape index: {}]
  %s7 = inlined_call_operand.hbm [shape: f32[1,8], index: 7, kind: output, shape index: {}]
  %s8 = sld [smem:[#allocation0]]
  $region38: #{regression_network_forward.1} parent=0
    _
  %s10 = ssub.s32 1, %s8
  %s11 = scalar_select 0, %s10, %s8
  %12 = sst [smem:[#allocation2]] %s6
  $region1: #{regression_network_forward.1} parent=0
    #allocation3 [shape = 'u8[512]{0}', space=vmem, size = 0x400, scoped, tag = 'output window, operand 0, single buffered']
    #allocation4 [shape = 's32[1]{0}', space=sflag, size = 0x4, scoped, tag = 'scoped memory for regression_network_forward.1']
    %13 = vsyncpa [#allocation4], 0
    // Predicated region
    $region2: #{regression_network_forward.1} parent=1 // pred_check
      _
    $region3: #{regression_network_forward.1} parent=1 // pred_check_branch
      %15 = sbr.rel (0) target = $region5
    $region4: #{regression_network_forward.1} parent=1 // pred_region
      _
    $region5: #{regression_network_forward.1} parent=1 // pred_fallthru
      _
    // Predicated region
    $region6: #{regression_network_forward.1} parent=1 // pred_check
      _
    $region7: #{regression_network_forward.1} parent=1 // pred_check_branch
      %17 = sbr.rel (0) target = $region9
    $region8: #{regression_network_forward.1} parent=1 // pred_region
      _
    $region9: #{regression_network_forward.1} parent=1 // pred_fallthru
      _
    // Predicated region
    $region10: #{regression_network_forward.1} parent=1 // pred_check
      _
    $region11: #{regression_network_forward.1} parent=1 // pred_check_branch
      %19 = sbr.rel (0) target = $region13
    $region12: #{regression_network_forward.1} parent=1 // pred_region
      _
    $region13: #{regression_network_forward.1} parent=1 // pred_fallthru
      _
    // Predicated region
    $region14: #{regression_network_forward.1} parent=1 // pred_check
      _
    $region15: #{regression_network_forward.1} parent=1 // pred_check_branch
      %21 = sbr.rel (0) target = $region17
    $region16: #{regression_network_forward.1} parent=1 // pred_region
      _
    $region17: #{regression_network_forward.1} parent=1 // pred_fallthru
      _
    // Predicated region
    $region18: #{regression_network_forward.1} parent=1 // pred_check
      _
    $region19: #{regression_network_forward.1} parent=1 // pred_check_branch
      %23 = sbr.rel (0) target = $region21
    $region20: #{regression_network_forward.1} parent=1 // pred_region
      _
    $region21: #{regression_network_forward.1} parent=1 // pred_fallthru
      _
    // Predicated region
    $region22: #{regression_network_forward.1} parent=1 // pred_check
      _
    $region23: #{regression_network_forward.1} parent=1 // pred_check_branch
      %25 = sbr.rel (0) target = $region25
    $region24: #{regression_network_forward.1} parent=1 // pred_region
      _
    $region25: #{regression_network_forward.1} parent=1 // pred_fallthru
      _
    // Predicated region
    $region26: #{regression_network_forward.1} parent=1 // pred_check
      _
    $region27: #{regression_network_forward.1} parent=1 // pred_check_branch
      %27 = sbr.rel (0) target = $region29
    $region28: #{regression_network_forward.1} parent=1 // pred_region
      _
    $region29: #{regression_network_forward.1} parent=1 // pred_fallthru
      _
    %v29 = vld [vmem:[%s0] sm:$0xf]
    %v30 = vld [vmem:[%s1] sm:$0xf]
    %v31 = vld [vmem:[%s1 + $0x4] sm:$0xf]
    %v32 = vld [vmem:[%s1 + $0x8] sm:$0xf]
    %v33 = vld [vmem:[%s1 + $0xc] sm:$0xf]
    %v34 = vld [vmem:[%s1 + $0x10] sm:$0xf]
    %v35 = vld [vmem:[%s1 + $0x14] sm:$0xf]
    %v36 = vld [vmem:[%s1 + $0x18] sm:$0xf]
    %v37 = vld [vmem:[%s1 + $0x1c] sm:$0xf]
    %v38 = vld [vmem:[%s2] sm:$0xff]
    %v39 = vld [vmem:[%s2 + $0x8] sm:$0xff]
    %v40 = vld [vmem:[%s2 + $0x10] sm:$0xff]
    %v41 = vld [vmem:[%s2 + $0x18] sm:$0xff]
    %v42 = vld [vmem:[%s2 + $0x20] sm:$0xff]
    %v43 = vld [vmem:[%s2 + $0x28] sm:$0xff]
    %v44 = vld [vmem:[%s2 + $0x30] sm:$0xff]
    %v45 = vld [vmem:[%s2 + $0x38] sm:$0xff]
    %47 = vset.pattern.permute.xlu0 0
    %48 = vperm.xlu0 %47, %v38
    %v49 = vpop.permute.xlu0 %48
    %52 = vset.pattern.permute.xlu0 0
    %53 = vperm.xlu0 %52, %v39
    %v54 = vpop.permute.xlu0 %53
    %57 = vset.pattern.permute.xlu0 0
    %58 = vperm.xlu0 %57, %v40
    %v59 = vpop.permute.xlu0 %58
    %62 = vset.pattern.permute.xlu0 0
    %63 = vperm.xlu0 %62, %v41
    %v64 = vpop.permute.xlu0 %63
    %67 = vset.pattern.permute.xlu0 0
    %68 = vperm.xlu0 %67, %v42
    %v69 = vpop.permute.xlu0 %68
    %72 = vset.pattern.permute.xlu0 0
    %73 = vperm.xlu0 %72, %v43
    %v74 = vpop.permute.xlu0 %73
    %77 = vset.pattern.permute.xlu0 0
    %78 = vperm.xlu0 %77, %v44
    %v79 = vpop.permute.xlu0 %78
    %82 = vset.pattern.permute.xlu0 0
    %83 = vperm.xlu0 %82, %v45
    %v84 = vpop.permute.xlu0 %83
    %v94 = vunpack.c.l.b16 %v30
    %v95 = vunpack.c.l.b16 %v31
    %v96 = vunpack.c.l.b16 %v32
    %v97 = vunpack.c.l.b16 %v33
    %v98 = vunpack.c.l.b16 %v34
    %v99 = vunpack.c.l.b16 %v35
    %v100 = vunpack.c.l.b16 %v36
    %v101 = vunpack.c.l.b16 %v37
    %v102 = vpack.c.b16 %v95, %v94
    %v103 = vpack.c.b16 %v97, %v96
    %v104 = vpack.c.b16 %v99, %v98
    %v105 = vpack.c.b16 %v101, %v100
    %vm106 = vcmask 261120
    %v108 = vsel %vm106, %v102, 0
    %v111 = vsel %vm106, %v103, 0
    %v114 = vsel %vm106, %v104, 0
    %v117 = vsel %vm106, %v105, 0
    %v120 = vsel %vm106, %v29, 0
    %122 = vmatprep.subr.bf16.mxu0 0
    %123 = vmatpush1.bf16.xpose.msra.mxu0 %v120
    %124 = vmatprep.subr.bf16.mxu0 0
    %125 = vmatpush1.bf16.xpose.msra.mxu0 0
    %126 = vmatprep.subr.bf16.mxu0 0
    %127 = vmatpush1.bf16.xpose.msra.mxu0 0
    %128 = vmatprep.subr.bf16.mxu0 0
    %129 = vmatpush1.bf16.xpose.msra.mxu0 0
    %130 = vmatprep.subr.bf16.mxu0 0
    %131 = vmatpush1.bf16.xpose.msra.mxu0 0
    %132 = vmatprep.subr.bf16.mxu0 0
    %133 = vmatpush1.bf16.xpose.msra.mxu0 0
    %134 = vmatprep.subr.bf16.mxu0 0
    %135 = vmatpush1.bf16.xpose.msra.mxu0 0
    %136 = vmatprep.subr.bf16.mxu0 0
    %137 = vmatpush1.bf16.xpose.msra.mxu0 0
    %138 = vmatprep.subr.bf16.mxu0 0
    %139 = vmatpush1.bf16.xpose.msra.mxu0 0
    %140 = vmatprep.subr.bf16.mxu0 0
    %141 = vmatpush1.bf16.xpose.msra.mxu0 0
    %142 = vmatprep.subr.bf16.mxu0 0
    %143 = vmatpush1.bf16.xpose.msra.mxu0 0
    %144 = vmatprep.subr.bf16.mxu0 0
    %145 = vmatpush1.bf16.xpose.msra.mxu0 0
    %146 = vmatprep.subr.bf16.mxu0 0
    %147 = vmatpush1.bf16.xpose.msra.mxu0 0
    %148 = vmatprep.subr.bf16.mxu0 0
    %149 = vmatpush1.bf16.xpose.msra.mxu0 0
    %150 = vmatprep.subr.bf16.mxu0 0
    %151 = vmatpush1.bf16.xpose.msra.mxu0 0
    %152 = vmatprep.subr.bf16.mxu0 0
    %153 = vmatpush1.bf16.xpose.msra.mxu0 0
    %154 = vmatprep.mubr.bf16.mxu0 0
    %155 = vmatmul.mubr.bf16.gmra.mrb[0].mxu0 %v108
    %v156 = vpop.f32.mrb[0].mxu0
    %v157 = vadd.f32 %v49, %v156
    %v158 = vpop.f32.mrb[0].mxu0
    %v159 = vpop.f32.mrb[0].mxu0
    %v160 = vadd.f32 %v54, %v159
    %v161 = vpop.f32.mrb[0].mxu0
    %162 = vmatprep.mubr.bf16.mxu0 0
    %163 = vmatmul.mubr.bf16.gmra.mrb[0].mxu0 %v111
    %v164 = vpop.f32.mrb[0].mxu0
    %v165 = vadd.f32 %v59, %v164
    %v166 = vpop.f32.mrb[0].mxu0
    %v167 = vpop.f32.mrb[0].mxu0
    %v168 = vadd.f32 %v64, %v167
    %v169 = vpop.f32.mrb[0].mxu0
    %170 = vmatprep.mubr.bf16.mxu0 0
    %171 = vmatmul.mubr.bf16.gmra.mrb[0].mxu0 %v114
    %v172 = vpop.f32.mrb[0].mxu0
    %v173 = vadd.f32 %v69, %v172
    %v174 = vpop.f32.mrb[0].mxu0
    %v175 = vpop.f32.mrb[0].mxu0
    %v176 = vadd.f32 %v74, %v175
    %v177 = vpop.f32.mrb[0].mxu0
    %178 = vmatprep.mubr.bf16.mxu0 0
    %179 = vmatmul.mubr.bf16.gmra.mrb[0].mxu0 %v117
    %v180 = vpop.f32.mrb[0].mxu0
    %v181 = vadd.f32 %v79, %v180
    %v182 = vpop.f32.mrb[0].mxu0
    %v183 = vpop.f32.mrb[0].mxu0
    %v184 = vadd.f32 %v84, %v183
    %v185 = vpop.f32.mrb[0].mxu0
    %186 = vdwg.mxu0
    %v187 = vmax.f32 %v157, 0.0
    %v188 = vmax.f32 %v160, 0.0
    %v189 = vmax.f32 %v165, 0.0
    %v190 = vmax.f32 %v168, 0.0
    %v191 = vmax.f32 %v173, 0.0
    %v192 = vmax.f32 %v176, 0.0
    %v193 = vmax.f32 %v181, 0.0
    %v194 = vmax.f32 %v184, 0.0
    %v195 = vld [vmem:[%s3] sm:$0xf]
    %v196 = vld [vmem:[%s3 + $0x4] sm:$0xf]
    %v197 = vld [vmem:[%s3 + $0x8] sm:$0xf]
    %v198 = vld [vmem:[%s3 + $0xc] sm:$0xf]
    %v199 = vpack.c.bf16 %v188, %v187
    %v200 = vpack.c.bf16 %v190, %v189
    %v201 = vpack.c.bf16 %v192, %v191
    %v202 = vpack.c.bf16 %v194, %v193
    %v203 = vld [vmem:[%s4] sm:$0xff]
    %v204 = vld [vmem:[%s4 + $0x8] sm:$0xff]
    %v205 = vld [vmem:[%s4 + $0x10] sm:$0xff]
    %v206 = vld [vmem:[%s4 + $0x18] sm:$0xff]
    %208 = vset.pattern.permute.xlu0 0
    %209 = vperm.xlu0 %208, %v203
    %v210 = vpop.permute.xlu0 %209
    %213 = vset.pattern.permute.xlu0 0
    %214 = vperm.xlu0 %213, %v204
    %v215 = vpop.permute.xlu0 %214
    %218 = vset.pattern.permute.xlu0 0
    %219 = vperm.xlu0 %218, %v205
    %v220 = vpop.permute.xlu0 %219
    %223 = vset.pattern.permute.xlu0 0
    %224 = vperm.xlu0 %223, %v206
    %v225 = vpop.permute.xlu0 %224
    %v231 = vunpack.c.l.b16 %v195
    %v232 = vunpack.c.l.b16 %v196
    %v233 = vunpack.c.l.b16 %v197
    %v234 = vunpack.c.l.b16 %v198
    %v235 = vpack.c.b16 %v232, %v231
    %v236 = vpack.c.b16 %v234, %v233
    %vm237 = vcmask 523264
    %v239 = vsel %vm237, %v235, 0
    %v242 = vsel %vm237, %v236, 0
    %244 = vmatprep.subr.bf16.mxu0 0
    %245 = vmatpush1.bf16.msra.mxu0 %v199
    %246 = vmatprep.subr.bf16.mxu0 0
    %247 = vmatpush1.bf16.msra.mxu0 %v200
    %248 = vmatprep.subr.bf16.mxu0 0
    %249 = vmatpush1.bf16.msra.mxu0 %v201
    %250 = vmatprep.subr.bf16.mxu0 0
    %251 = vmatpush1.bf16.msra.mxu0 %v202
    %252 = vmatprep.subr.bf16.mxu0 0
    %253 = vmatpush1.bf16.msra.mxu0 0
    %254 = vmatprep.subr.bf16.mxu0 0
    %255 = vmatpush1.bf16.msra.mxu0 0
    %256 = vmatprep.subr.bf16.mxu0 0
    %257 = vmatpush1.bf16.msra.mxu0 0
    %258 = vmatprep.subr.bf16.mxu0 0
    %259 = vmatpush1.bf16.msra.mxu0 0
    %260 = vmatprep.subr.bf16.mxu0 0
    %261 = vmatpush1.bf16.msra.mxu0 0
    %262 = vmatprep.subr.bf16.mxu0 0
    %263 = vmatpush1.bf16.msra.mxu0 0
    %264 = vmatprep.subr.bf16.mxu0 0
    %265 = vmatpush1.bf16.msra.mxu0 0
    %266 = vmatprep.subr.bf16.mxu0 0
    %267 = vmatpush1.bf16.msra.mxu0 0
    %268 = vmatprep.subr.bf16.mxu0 0
    %269 = vmatpush1.bf16.msra.mxu0 0
    %270 = vmatprep.subr.bf16.mxu0 0
    %271 = vmatpush1.bf16.msra.mxu0 0
    %272 = vmatprep.subr.bf16.mxu0 0
    %273 = vmatpush1.bf16.msra.mxu0 0
    %274 = vmatprep.subr.bf16.mxu0 0
    %275 = vmatpush1.bf16.msra.mxu0 0
    %276 = vmatprep.mubr.bf16.mxu0 0
    %277 = vmatmul.mubr.bf16.gmra.mrb[0].mxu0 %v239
    %v278 = vpop.f32.mrb[0].mxu0
    %v279 = vadd.f32 %v210, %v278
    %v280 = vpop.f32.mrb[0].mxu0
    %v281 = vpop.f32.mrb[0].mxu0
    %v282 = vadd.f32 %v215, %v281
    %v283 = vpop.f32.mrb[0].mxu0
    %284 = vmatprep.mubr.bf16.mxu0 0
    %285 = vmatmul.mubr.bf16.gmra.mrb[0].mxu0 %v242
    %v286 = vpop.f32.mrb[0].mxu0
    %v287 = vadd.f32 %v220, %v286
    %v288 = vpop.f32.mrb[0].mxu0
    %v289 = vpop.f32.mrb[0].mxu0
    %v290 = vadd.f32 %v225, %v289
    %v291 = vpop.f32.mrb[0].mxu0
    %292 = vdwg.mxu0
    %v293 = vmax.f32 %v279, 0.0
    %v294 = vmax.f32 %v282, 0.0
    %v295 = vmax.f32 %v287, 0.0
    %v296 = vmax.f32 %v290, 0.0
    %v297 = vld [vmem:[%s5] sm:$0xff]
    %v298 = vld [vmem:[%s5 + $0x8] sm:$0xff]
    %v299 = vld [vmem:[%s5 + $0x10] sm:$0xff]
    %v300 = vld [vmem:[%s5 + $0x18] sm:$0xff]
    %302 = vset.pattern.permute.xlu0 0
    %303 = vperm.xlu0 %302, %v297
    %v304 = vpop.permute.xlu0 %303
    %307 = vset.pattern.permute.xlu0 0
    %308 = vperm.xlu0 %307, %v298
    %v309 = vpop.permute.xlu0 %308
    %312 = vset.pattern.permute.xlu0 0
    %313 = vperm.xlu0 %312, %v299
    %v314 = vpop.permute.xlu0 %313
    %317 = vset.pattern.permute.xlu0 0
    %318 = vperm.xlu0 %317, %v300
    %v319 = vpop.permute.xlu0 %318
    %v321 = vmul.f32 %v293, %v304
    %v322 = vmul.f32 %v294, %v309
    %v323 = vmul.f32 %v295, %v314
    %v324 = vmul.f32 %v296, %v319
    %vm325 = vcmask 64512
    %v326 = vsel %vm325, %v321, 0.0
    %v327 = vsel %vm325, %v322, 0.0
    %v328 = vadd.f32 %v326, %v327
    %v329 = vsel %vm325, %v323, 0.0
    %v330 = vadd.f32 %v328, %v329
    %v331 = vsel %vm325, %v324, 0.0
    %v332 = vadd.f32 %v330, %v331
    %v333 = vrot.slane %v332, 4
    %v334 = vadd.f32 %v332, %v333
    %v335 = vrot.slane %v334, 2
    %v336 = vadd.f32 %v334, %v335
    %v337 = vrot.slane %v336, 1
    %v338 = vadd.f32 %v336, %v337
    %s339 = sld [smem:[#allocation2]]
    %v340 = vstv %s339
    %v341 = vadd.f32 %v338, %v340
    %vm342 = vcmask 57344
    %343 = vst.msk [vmem:[#allocation3] sm:$0x1] %vm342, %v341
    // Predicated region
    $region30: #{regression_network_forward.1} parent=1 // pred_check
      _
    $region31: #{regression_network_forward.1} parent=1 // pred_check_branch
      %345 = sbr.rel (0) target = $region33
    $region32: #{regression_network_forward.1} parent=1 // pred_region
      %s347 = ssub.s32 16, 16
      %348 = vsyncadd [#allocation4], %s347
      %s350 = sshll.u32 [#allocation3], 4
      %s351 = int_to_ptr.vmem [resolvable:$true] %s350
      %353 = dma.vmem_to_hbm [thread:$0]  %s351, 16, %s7, [#allocation4]
    $region33: #{regression_network_forward.1} parent=1 // pred_fallthru
      _
    // Predicated region
    $region34: #{regression_network_forward.1} parent=1 // pred_check
      _
    $region35: #{regression_network_forward.1} parent=1 // pred_check_branch
      %355 = sbr.rel (0) target = $region37
    $region36: #{regression_network_forward.1} parent=1 // pred_region
      %356 = dma.done [#allocation4], 16
    $region37: #{regression_network_forward.1} parent=1 // pred_fallthru
      _
    %357 = vsyncpa [#allocation4], 1

</llo_original>
